<compile_context>
chip_gen: v7x
topology: tpu7x:2x2x1
jax: 0.10.0
libtpu: 0.0.40
codegen_flags: <defaults>
</compile_context>

<pallas_src>
import jax
import jax.numpy as jnp
from jax import lax
from jax.experimental import pallas as pl
from jax.experimental.pallas import tpu as pltpu


def _round_up(v, m):
    return ((v + m - 1) // m) * m


def attention_layer_kernel(b_ref, x_ref, w_ref, o_ref):
    # b_ref : SMEM (1,) f32     Linear(F,1) bias
    # x_ref : VMEM (TN, K, F)   slab of TN batch rows (native dtype)
    # w_ref : VMEM (1, F)       Linear(F,1) weight (resident; constant index_map)
    # o_ref : VMEM (TN, F)      lane-dense output slab
    x = x_ref[...]
    w = w_ref[...]
    b = b_ref[0]
    tn, K, F = x.shape

    if x.dtype == jnp.float32:
        # Pure-VPU f32 path (input is already f32 -> no extra full-slab cast;
        # also the right path for v5e, which has no bf16 VALU):
        #   scores[n,k] = sum_f x[n,k,f] * w[f] + b      (lane reduce over F)
        #   out[n,f]    = sum_k scores[n,k] * x[n,k,f]   (sublane reduce over K)
        scores = jnp.sum(x * w, axis=-1, keepdims=True) + b          # (TN, K, 1)
        out = jnp.sum(scores * x, axis=1)                            # (TN, F)
    else:
        # Sub-32-bit path (bf16/fp16): elementwise math stays packed in the
        # native dtype on the VPU; reductions accumulate in f32.
        if K % 8 == 0:
            # Offload the F-reduction to the otherwise-idle MXU (free filler in
            # a mem-bound kernel; keeps the lane-reduce off the XLU slots on
            # v6e/v7x). K is the sublane dim, so this reshape is layout-friendly.
            x2 = x.reshape(tn * K, F)
            scores = lax.dot_general(
                x2, w, (((1,), (1,)), ((), ())),
                preferred_element_type=jnp.float32).reshape(tn, K, 1) + b
        else:
            scores = jnp.sum((x * w).astype(jnp.float32), axis=-1,
                             keepdims=True) + b
        att = scores.astype(x.dtype)                 # matches torch's matmul input dtype
        out = jnp.sum((att * x).astype(jnp.float32), axis=1)         # f32 accumulation

    o_ref[...] = out.astype(o_ref.dtype)


def _choose_block_rows(N, K, F, itemsize, target_tile_bytes, block_rows):
    sub = 8 * max(1, 4 // itemsize)        # sublane packing: f32->8, bf16->16, int8->32
    if block_rows is not None:
        tn = max(sub, _round_up(block_rows, sub))
    else:
        row_bytes = max(1, K * F * itemsize)
        tn = max(sub, (target_tile_bytes // row_bytes) // sub * sub)
        # Keep >=4 grid steps (>=2 per v7x TensorCore) once N is big enough, so
        # each core's DMA pipeline always has a next tile to double-buffer.
        if N >= 4 * sub:
            tn = min(tn, max(sub, (N // 4) // sub * sub))
    # never bigger than the (sublane-rounded) problem itself
    return min(tn, _round_up(N, sub))


def attention_layer(x, w, b, *, block_rows=None, target_tile_bytes=8 << 20):
    """x: (N, K, F), w: (1, F), b: (1,)  ->  (N, F) in x.dtype."""
    N, K, F = x.shape
    w = w.astype(x.dtype)
    itemsize = jnp.dtype(x.dtype).itemsize

    tn = _choose_block_rows(N, K, F, itemsize, target_tile_bytes, block_rows)
    grid = (pl.cdiv(N, tn),)     # partial last block handled by Pallas masking: no pad/slice

    # Scoped VMEM budget: double-buffered x + out tiles, plus one f32 tile's
    # worth of in-kernel temporaries (products / reduce partials), clamped to
    # ~80% of this chip's physical VMEM per TensorCore (v7x: 64 MiB).
    x_tile = tn * K * F * itemsize
    out_tile = tn * F * itemsize
    tmp = tn * K * F * 4
    budget = 2 * (x_tile + out_tile) + tmp + (4 << 20)
    try:
        vmem_cap = pltpu.get_tpu_info().vmem_capacity_bytes
    except Exception:
        vmem_cap = 64 << 20      # v7x has the smallest VMEM per TensorCore
    vmem_limit = int(min(max(budget, 32 << 20), int(0.8 * vmem_cap)))

    cost = pl.CostEstimate(
        flops=4 * N * K * F,                       # two multiply-reduce passes over x
        transcendentals=0,
        bytes_accessed=N * K * F * itemsize + N * F * itemsize + F * itemsize + 4,
    )

    # NOTE: if production F is far below 128, packing features so the last dim
    # is a multiple of 128 (once, outside the hot path) makes stores unmasked.
    return pl.pallas_call(
        attention_layer_kernel,
        out_shape=jax.ShapeDtypeStruct((N, F), x.dtype),
        grid_spec=pltpu.PrefetchScalarGridSpec(
            num_scalar_prefetch=0,
            grid=grid,
            in_specs=[
                pl.BlockSpec(memory_space=pltpu.MemorySpace.SMEM),   # bias (1,) f32
                pl.BlockSpec((tn, K, F), lambda n: (n, 0, 0)),       # x slab
                pl.BlockSpec((1, F), lambda n: (0, 0)),              # weight, resident
            ],
            out_specs=pl.BlockSpec((tn, F), lambda n: (n, 0)),       # lane-dense 2D out
        ),
        compiler_params=pltpu.CompilerParams(
            dimension_semantics=("parallel",),     # v7x megacore shards this axis
            vmem_limit_bytes=vmem_limit,
        ),
        cost_estimate=cost,
    )(b.astype(jnp.float32), x, w)


if __name__ == "__main__":
    key = jax.random.PRNGKey(0)
    kx, kw, kb = jax.random.split(key, 3)

    # Small shapes consistent with the module: N nodes, K views, F features.
    N, K, F = 12, 16, 32           # N deliberately NOT a multiple of the row block
    x = jax.random.normal(kx, (N, K, F), dtype=jnp.float32)

    bound = 1.0 / (F ** 0.5)       # PyTorch Linear default init range
    w = jax.random.uniform(kw, (1, F), jnp.float32, -bound, bound)
    b = jax.random.uniform(kb, (1,), jnp.float32, -bound, bound)

    def ref_forward(xr, wr, br):
        att = jnp.einsum('nkf,f->nk', xr, wr[0]) + br[0]   # (N, K), NO softmax
        return jnp.einsum('nk,nkf->nf', att, xr)           # (N, F)

    # f32 path: 2-step grid with a partial last block (cdiv(12, 8) = 2),
    # no wrapper-side pad/slice.
    out = jax.block_until_ready(attention_layer(x, w, b, block_rows=8))
    ref = ref_forward(x, w, b)
    assert out.shape == (N, F)
    assert jnp.allclose(out, ref, atol=1e-4, rtol=1e-4), "f32 mismatch vs reference"

    # bf16 path: packed VPU elementwise + MXU F-reduction with f32 accumulation.
    xb, wb, bb = (x.astype(jnp.bfloat16), w.astype(jnp.bfloat16),
                  b.astype(jnp.bfloat16))
    out_b = jax.block_until_ready(attention_layer(xb, wb, bb, block_rows=8))
    ref_b = ref_forward(xb.astype(jnp.float32), wb.astype(jnp.float32),
                        bb.astype(jnp.float32))
    assert out_b.shape == (N, F)
    assert jnp.allclose(out_b.astype(jnp.float32), ref_b, atol=5e-1, rtol=5e-2), \
        "bf16 mismatch vs reference"

    print("KERNEL_OK")
</pallas_src>

<mosaic_0001>
module attributes {stable_mosaic.version = 11 : i64} {
  func.func @attention_layer_kernel(%arg0: i32, %arg1: memref<1xf32, #tpu.memory_space<smem>>, %arg2: memref<8x16x32xf32, #tpu.memory_space<vmem>>, %arg3: memref<1x32xf32, #tpu.memory_space<vmem>>, %arg4: memref<8x32xf32, #tpu.memory_space<vmem>>) attributes {dimension_semantics = [#tpu.dimension_semantics<parallel>], iteration_bounds = array<i64: 2>, scalar_prefetch = 0 : i64, scratch_operands = 0 : i64, tpu.core_type = #tpu.core_type<tc>, window_params = [{transform_indices = @transform_0, window_bounds = array<i64: 1>}, {transform_indices = @transform_1, window_bounds = array<i64: 8, 16, 32>}, {pipeline_mode = #tpu.pipeline_mode<synchronous>, transform_indices = @transform_2, window_bounds = array<i64: 1, 32>}, {transform_indices = @transform_3, window_bounds = array<i64: 8, 32>}]} {
    %c0 = arith.constant 0 : index
    %c0_0 = arith.constant 0 : index
    %c0_1 = arith.constant 0 : index
    %0 = vector.load %arg2[%c0, %c0_0, %c0_1] : memref<8x16x32xf32, #tpu.memory_space<vmem>>, vector<8x16x32xf32>
    %c0_2 = arith.constant 0 : index
    %c0_3 = arith.constant 0 : index
    %1 = vector.load %arg3[%c0_2, %c0_3] : memref<1x32xf32, #tpu.memory_space<vmem>>, vector<1x32xf32>
    %c0_4 = arith.constant 0 : index
    %2 = memref.load %arg1[%c0_4] : memref<1xf32, #tpu.memory_space<smem>>
    %3 = vector.shape_cast %1 : vector<1x32xf32> to vector<1x1x32xf32>
    %4 = vector.broadcast %3 : vector<1x1x32xf32> to vector<8x16x32xf32>
    %5 = arith.mulf %0, %4 : vector<8x16x32xf32>
    %cst = arith.constant dense<0.000000e+00> : vector<8x16xf32>
    %6 = vector.multi_reduction <add>, %5, %cst [2] : vector<8x16x32xf32> to vector<8x16xf32>
    %7 = vector.shape_cast %6 : vector<8x16xf32> to vector<8x16x1xf32>
    %8 = vector.broadcast %2 : f32 to vector<8x16x1xf32>
    %9 = arith.addf %7, %8 : vector<8x16x1xf32>
    %10 = vector.broadcast %9 : vector<8x16x1xf32> to vector<8x16x32xf32>
    %11 = arith.mulf %10, %0 : vector<8x16x32xf32>
    %cst_5 = arith.constant dense<0.000000e+00> : vector<8x32xf32>
    %12 = vector.multi_reduction <add>, %11, %cst_5 [1] : vector<8x16x32xf32> to vector<8x32xf32>
    %c0_6 = arith.constant 0 : index
    %c0_7 = arith.constant 0 : index
    %13 = vector.load %arg4[%c0_6, %c0_7] : memref<8x32xf32, #tpu.memory_space<vmem>>, vector<8x32xf32>
    tpu.vector_store %arg4[%c0_6, %c0_7], %12 {strides = array<i32>} : memref<8x32xf32, #tpu.memory_space<vmem>>, vector<8x32xf32>,
    return
  }
  func.func @transform_0(%arg0: i32) -> i32 {
    %c0_i32 = arith.constant 0 : i32
    %c0_i32_0 = arith.constant 0 : i32
    return %c0_i32 : i32
  }
  func.func @transform_1(%arg0: i32) -> (i32, i32, i32) {
    %c0_i32 = arith.constant 0 : i32
    %c0_i32_0 = arith.constant 0 : i32
    %c0_i32_1 = arith.constant 0 : i32
    return %arg0, %c0_i32, %c0_i32_0 : i32, i32, i32
  }
  func.func @transform_2(%arg0: i32) -> (i32, i32) {
    %c0_i32 = arith.constant 0 : i32
    %c0_i32_0 = arith.constant 0 : i32
    %c0_i32_1 = arith.constant 0 : i32
    return %c0_i32, %c0_i32_0 : i32, i32
  }
  func.func @transform_3(%arg0: i32) -> (i32, i32) {
    %c0_i32 = arith.constant 0 : i32
    %c0_i32_0 = arith.constant 0 : i32
    return %arg0, %c0_i32 : i32, i32
  }
}

</mosaic_0001>

<llo_original>
// kernel: tpu_custom_call.1
$region0: #{tpu_custom_call.1}
  #allocation0 [shape = 'u32[]', space=smem, size = 0x4, offset = 0x4, fixed_abs, tag = 'smem constant byte address 0x4 - core index']
  #allocation1 [shape = 'u32[144,128]{1,0:T(1,128)}', space=vmem, size = 0x12000, scoped, tag = 'internal scratch']
  #allocation2 [shape = 'f32[1]{0:T(128)S(6)}', space=smem, size = 0x200, scoped, tag = 'scoped memory for tpu_custom_call.1']
  %s0 = inlined_call_operand.<no memory space> [shape: f32[1], index: 0, kind: input, shape index: {}]
  %s1 = inlined_call_operand.hbm [shape: f32[12,16,32], index: 1, kind: input, shape index: {}]
  %s2 = inlined_call_operand.vmem [shape: f32[1,32], index: 2, kind: input, shape index: {}]
  %s3 = inlined_call_operand.hbm [shape: f32[12,32], index: 3, kind: output, shape index: {}]
  %s4 = sld [smem:[#allocation0]]
  $region49: #{tpu_custom_call.1} parent=0
    _
  %s6 = ssub.s32 1, %s4
  %s7 = scalar_select 0, %s6, %s4
  %8 = sst [smem:[#allocation2]] %s0
  $region1: #{tpu_custom_call.1} parent=0
    #allocation3 [shape = 'u8[131072]{0}', space=vmem, size = 0x20000, scoped, tag = 'input window, operand 1']
    #allocation4 [shape = 's32[2]{0}', space=sflag, size = 0x8, scoped, tag = 'scoped memory for tpu_custom_call.1']
    #allocation5 [shape = 's32[2]{0}', space=sflag, size = 0x8, scoped, tag = 'scoped memory for tpu_custom_call.1']
    #allocation6 [shape = 'u8[8192]{0}', space=vmem, size = 0x2000, scoped, tag = 'output window, operand 0']
    %9 = vsyncpa [#allocation4], 0
    %s10 = scalar_lea.sflag [#allocation4], 1
    %11 = vsyncpa %s10, 0
    %12 = vsyncpa [#allocation5], 0
    %s13 = scalar_lea.sflag [#allocation5], 1
    %14 = vsyncpa %s13, 0
    loop: start=0, step=1, limit=4
    $region2: #{tpu_custom_call.1} parent=1 // loop_pre_header
      _
    $region3: #{tpu_custom_call.1} parent=1 // loop_header
      %s16 = sphi 0, %s20
      %p17 = scmp.ge.s32.totalorder %s16, 4
      %s24 = sphi 0, %s24
      %s26 = sphi 0, %s24
      %s27 = sphi 0, %s26
      %s41 = sphi 0, %s27
      %s47 = sphi 0, %s49
      %s50 = sphi 0, %s47
      %s51 = sphi 0, %s50
      %s67 = sphi 0, %s51
      %s71 = sphi 0, %s71
      %s73 = sphi 0, %s71
      %s74 = sphi 0, %s73
      %s88 = sphi 0, %s74
      %s94 = sphi 0, %s96
      %s97 = sphi 0, %s94
      %s98 = sphi 0, %s97
      %s114 = sphi 0, %s98
    $region4: #{tpu_custom_call.1} parent=1 // loop_header_branch
      %19 = sbr.rel (%p17) target = $region8
    $region5: #{tpu_custom_call.1} parent=1 // loop_body
      %s21 = ssub.s32 %s16, 1
      %s22 = ssub.s32 %s16, 2
      %s23 = sadd.s32 %s16, 1
      %s25 = sadd.s32 %s24, 1
      %p28 = scmp.eq.s32.totalorder %s16, 1
      %p29 = scmp.ne.s32.totalorder %s24, %s26
      %p30 = scmp.eq.s32.totalorder %s16, 0
      %p31 = por %p29, %p30
      %p32 = scmp.ne.s32.totalorder %s24, %s26
      %p33 = scmp.eq.s32.totalorder %s21, 1
      %p34 = por %p32, %p33
      %p35 = scmp.ne.s32.totalorder %s26, %s27
      %p36 = scmp.eq.s32.totalorder %s21, 0
      %p37 = por %p35, %p36
      %p38 = scmp.ne.s32.totalorder %s26, %s27
      %p39 = scmp.eq.s32.totalorder %s22, 1
      %p40 = por %p38, %p39
      %p42 = scmp.ne.s32.totalorder %s27, %s41
      %p43 = scmp.eq.s32.totalorder %s22, 0
      %p44 = por %p42, %p43
      %s45 = ssub.s32 %s16, %s23
      %p46 = scmp.eq.s32.totalorder %s45, 0
      %s48 = sadd.s32 %s47, 1
      %s49 = scalar_select %p46, %s47, %s48
      %p52 = pneg %p46
      %p53 = scmp.eq.s32.totalorder %s16, 1
      %p54 = por %p52, %p53
      %p55 = scmp.ne.s32.totalorder %s47, %s50
      %p56 = scmp.eq.s32.totalorder %s16, 0
      %p57 = por %p55, %p56
      %p58 = scmp.ne.s32.totalorder %s47, %s50
      %p59 = scmp.eq.s32.totalorder %s21, 1
      %p60 = por %p58, %p59
      %p61 = scmp.ne.s32.totalorder %s50, %s51
      %p62 = scmp.eq.s32.totalorder %s21, 0
      %p63 = por %p61, %p62
      %p64 = scmp.ne.s32.totalorder %s50, %s51
      %p65 = scmp.eq.s32.totalorder %s22, 1
      %p66 = por %p64, %p65
      %p68 = scmp.ne.s32.totalorder %s51, %s67
      %p69 = scmp.eq.s32.totalorder %s22, 0
      %p70 = por %p68, %p69
      %s72 = sadd.s32 %s71, 1
      %p75 = scmp.eq.s32.totalorder %s16, 1
      %p76 = scmp.ne.s32.totalorder %s71, %s73
      %p77 = scmp.eq.s32.totalorder %s16, 0
      %p78 = por %p76, %p77
      %p79 = scmp.ne.s32.totalorder %s71, %s73
      %p80 = scmp.eq.s32.totalorder %s21, 1
      %p81 = por %p79, %p80
      %p82 = scmp.ne.s32.totalorder %s73, %s74
      %p83 = scmp.eq.s32.totalorder %s21, 0
      %p84 = por %p82, %p83
      %p85 = scmp.ne.s32.totalorder %s73, %s74
      %p86 = scmp.eq.s32.totalorder %s22, 1
      %p87 = por %p85, %p86
      %p89 = scmp.ne.s32.totalorder %s74, %s88
      %p90 = scmp.eq.s32.totalorder %s22, 0
      %p91 = por %p89, %p90
      %s92 = ssub.s32 %s16, %s23
      %p93 = scmp.eq.s32.totalorder %s92, 0
      %s95 = sadd.s32 %s94, 1
      %s96 = scalar_select %p93, %s94, %s95
      %p99 = pneg %p93
      %p100 = scmp.eq.s32.totalorder %s16, 1
      %p101 = por %p99, %p100
      %p102 = scmp.ne.s32.totalorder %s94, %s97
      %p103 = scmp.eq.s32.totalorder %s16, 0
      %p104 = por %p102, %p103
      %p105 = scmp.ne.s32.totalorder %s94, %s97
      %p106 = scmp.eq.s32.totalorder %s21, 1
      %p107 = por %p105, %p106
      %p108 = scmp.ne.s32.totalorder %s97, %s98
      %p109 = scmp.eq.s32.totalorder %s21, 0
      %p110 = por %p108, %p109
      %p111 = scmp.ne.s32.totalorder %s97, %s98
      %p112 = scmp.eq.s32.totalorder %s22, 1
      %p113 = por %p111, %p112
      %p115 = scmp.ne.s32.totalorder %s98, %s114
      %p116 = scmp.eq.s32.totalorder %s22, 0
      %p117 = por %p115, %p116
      %p118 = scmp.le.s32.totalorder 1, %s16
      %p119 = scmp.lt.s32.totalorder %s16, 3
      %p120 = pnand %p118, %p119
      %p121 = pneg %p120
      // Predicated region
      $region9: #{tpu_custom_call.1} parent=5 // pred_check
        _
      $region10: #{tpu_custom_call.1} parent=5 // pred_check_branch
        %123 = sbr.rel (%p120) target = $region12
      $region11: #{tpu_custom_call.1} parent=5 // pred_region
        %s124 = ssub.s32 %s16, 1
        // Predicated region
        $region13: #{tpu_custom_call.1} parent=11 // pred_check
          %p125 = pneg %p37
        $region14: #{tpu_custom_call.1} parent=11 // pred_check_branch
          %127 = sbr.rel (%p125) target = $region16
        $region15: #{tpu_custom_call.1} parent=11 // pred_region
          _
        $region16: #{tpu_custom_call.1} parent=11 // pred_fallthru
          _
        // Predicated region
        $region17: #{tpu_custom_call.1} parent=11 // pred_check
          %p128 = pneg %p84
        $region18: #{tpu_custom_call.1} parent=11 // pred_check_branch
          %130 = sbr.rel (%p128) target = $region20
        $region19: #{tpu_custom_call.1} parent=11 // pred_region
          _
        $region20: #{tpu_custom_call.1} parent=11 // pred_fallthru
          _
      $region12: #{tpu_custom_call.1} parent=5 // pred_fallthru
        _
      %p131 = scmp.lt.s32.totalorder %s16, 2
      // Predicated region
      $region21: #{tpu_custom_call.1} parent=5 // pred_check
        %p132 = pneg %p131
      $region22: #{tpu_custom_call.1} parent=5 // pred_check_branch
        %134 = sbr.rel (%p132) target = $region24
      $region23: #{tpu_custom_call.1} parent=5 // pred_region
        // Predicated region
        $region25: #{tpu_custom_call.1} parent=23 // pred_check
          %p135 = pneg %p57
        $region26: #{tpu_custom_call.1} parent=23 // pred_check_branch
          %137 = sbr.rel (%p135) target = $region28
        $region27: #{tpu_custom_call.1} parent=23 // pred_region
          %s138 = sand.u32 %s47, 1
          %s139 = scalar_lea.sflag [#allocation4], %s138
          %s140 = sand.u32 %s47, 1
          %s141 = smul.addr %s140, 128
          %s142 = scalar_lea.vmem [#allocation3], %s141
          %s143 = smul.u32 8, %s16
          %s144 = ssub.s32 12, %s143
          %p145 = scmp.lt.s32.totalorder %s144, 8
          %s146 = scalar_select %p145, %s144, 8
          %s147 = smul.u32 128, %s146
          %s148 = smul.u32 %s147, 2
          %s150 = ssub.s32 2048, %s148
          %151 = vsyncadd %s139, %s150
          %p152 = scmp.ne.s32.totalorder 0, %s148
          %s153 = smul.addr %s143, 2
          %s154 = smul.addr %s153, 128
          %s155 = scalar_lea.hbm %s1, %s154
          %s156 = smul.u32 %s146, 2
          %s157 = smul.u32 8, %s156
          %s158 = sshll.u32 %s142, 4
          %s159 = int_to_ptr.vmem [resolvable:$true] %s158
          %s160 = sshll.u32 %s157, 4
          %164 = dma.hbm_to_vmem [thread:$0]  (%p152), %s155, %s160, %s159, %s139, 128, 128, 8
        $region28: #{tpu_custom_call.1} parent=23 // pred_fallthru
          _
      $region24: #{tpu_custom_call.1} parent=5 // pred_fallthru
        _
      %p165 = scmp.le.s32.totalorder 1, %s16
      %p166 = scmp.lt.s32.totalorder %s16, 3
      %p167 = pnand %p165, %p166
      %p168 = pneg %p167
      // Predicated region
      $region29: #{tpu_custom_call.1} parent=5 // pred_check
        _
      $region30: #{tpu_custom_call.1} parent=5 // pred_check_branch
        %170 = sbr.rel (%p167) target = $region32
      $region31: #{tpu_custom_call.1} parent=5 // pred_region
        %s171 = ssub.s32 %s16, 1
        %s172 = sand.u32 %s50, 1
        %s173 = scalar_lea.sflag [#allocation4], %s172
        %s174 = sand.u32 %s50, 1
        %s175 = smul.addr %s174, 128
        %s176 = scalar_lea.vmem [#allocation3], %s175
        // Predicated region
        $region33: #{tpu_custom_call.1} parent=31 // pred_check
          %p177 = pneg %p63
        $region34: #{tpu_custom_call.1} parent=31 // pred_check_branch
          %179 = sbr.rel (%p177) target = $region36
        $region35: #{tpu_custom_call.1} parent=31 // pred_region
          %180 = dma.done %s173, 2048
        $region36: #{tpu_custom_call.1} parent=31 // pred_fallthru
          _
        %p181 = pneg %p37
        %p182 = pneg %p34
        %s183 = sand.u32 %s50, 1
        %s184 = scalar_lea.sflag [#allocation4], %s183
        %s185 = sand.u32 %s50, 1
        %s186 = smul.addr %s185, 128
        %s187 = scalar_lea.vmem [#allocation3], %s186
        %p188 = pneg %p63
        %p189 = pneg %p60
        %p190 = pneg %p84
        %p191 = pneg %p81
        %p192 = pneg %p110
        %p193 = pneg %p107
        %s194 = sand.u32 %s97, 1
        %s195 = scalar_lea.sflag [#allocation5], %s194
        %s196 = sand.u32 %s97, 1
        %s197 = smul.addr %s196, 8
        %s198 = scalar_lea.vmem [#allocation6], %s197
        %s199 = smul.u32 8, %s21
        %s200 = ssub.s32 12, %s199
        %p201 = scmp.lt.s32.totalorder %s200, 8
        %s202 = scalar_select %p201, %s200, 8
        %s203 = smul.u32 128, %s202
        %s204 = smul.u32 %s203, 2
        %v205 = vld [vmem:[%s176] sm:$0xff]
        %v206 = vld [vmem:[%s176 + $0x8] sm:$0xff]
        %v207 = vld [vmem:[%s176 + $0x10] sm:$0xff]
        %v208 = vld [vmem:[%s176 + $0x18] sm:$0xff]
        %v209 = vld [vmem:[%s176 + $0x20] sm:$0xff]
        %v210 = vld [vmem:[%s176 + $0x28] sm:$0xff]
        %v211 = vld [vmem:[%s176 + $0x30] sm:$0xff]
        %v212 = vld [vmem:[%s176 + $0x38] sm:$0xff]
        %v213 = vld [vmem:[%s176 + $0x40] sm:$0xff]
        %v214 = vld [vmem:[%s176 + $0x48] sm:$0xff]
        %v215 = vld [vmem:[%s176 + $0x50] sm:$0xff]
        %v216 = vld [vmem:[%s176 + $0x58] sm:$0xff]
        %v217 = vld [vmem:[%s176 + $0x60] sm:$0xff]
        %v218 = vld [vmem:[%s176 + $0x68] sm:$0xff]
        %v219 = vld [vmem:[%s176 + $0x70] sm:$0xff]
        %v220 = vld [vmem:[%s176 + $0x78] sm:$0xff]
        %v221 = vld [vmem:[%s2] sm:$0x1]
        %s222 = sld [smem:[#allocation2]]
        %v224 = vlaneseq
        %v225 = vshrl.u32 %v224, 7
        %v226 = vsub.s32 0, %v225
        %v227 = vrot.slane %v221, %v226
        %v229 = vmul.f32 %v205, %v227
        %v230 = vmul.f32 %v206, %v227
        %v231 = vmul.f32 %v207, %v227
        %v232 = vmul.f32 %v208, %v227
        %v233 = vmul.f32 %v209, %v227
        %v234 = vmul.f32 %v210, %v227
        %v235 = vmul.f32 %v211, %v227
        %v236 = vmul.f32 %v212, %v227
        %v237 = vmul.f32 %v213, %v227
        %v238 = vmul.f32 %v214, %v227
        %v239 = vmul.f32 %v215, %v227
        %v240 = vmul.f32 %v216, %v227
        %v241 = vmul.f32 %v217, %v227
        %v242 = vmul.f32 %v218, %v227
        %v243 = vmul.f32 %v219, %v227
        %v244 = vmul.f32 %v220, %v227
        %vm245 = vcmask 261120
        %v246 = vsel %vm245, %v229, 0.0
        %247 = vadd.xlane.f32.xlu0 %v246
        %v248 = vpop.xlane.xlu0 %247
        %v249 = vsel %vm245, %v230, 0.0
        %250 = vadd.xlane.f32.xlu0 %v249
        %v251 = vpop.xlane.xlu0 %250
        %v252 = vsel %vm245, %v231, 0.0
        %253 = vadd.xlane.f32.xlu0 %v252
        %v254 = vpop.xlane.xlu0 %253
        %v255 = vsel %vm245, %v232, 0.0
        %256 = vadd.xlane.f32.xlu0 %v255
        %v257 = vpop.xlane.xlu0 %256
        %v258 = vsel %vm245, %v233, 0.0
        %259 = vadd.xlane.f32.xlu0 %v258
        %v260 = vpop.xlane.xlu0 %259
        %v261 = vsel %vm245, %v234, 0.0
        %262 = vadd.xlane.f32.xlu0 %v261
        %v263 = vpop.xlane.xlu0 %262
        %v264 = vsel %vm245, %v235, 0.0
        %265 = vadd.xlane.f32.xlu0 %v264
        %v266 = vpop.xlane.xlu0 %265
        %v267 = vsel %vm245, %v236, 0.0
        %268 = vadd.xlane.f32.xlu0 %v267
        %v269 = vpop.xlane.xlu0 %268
        %v270 = vsel %vm245, %v237, 0.0
        %271 = vadd.xlane.f32.xlu0 %v270
        %v272 = vpop.xlane.xlu0 %271
        %v273 = vsel %vm245, %v238, 0.0
        %274 = vadd.xlane.f32.xlu0 %v273
        %v275 = vpop.xlane.xlu0 %274
        %v276 = vsel %vm245, %v239, 0.0
        %277 = vadd.xlane.f32.xlu0 %v276
        %v278 = vpop.xlane.xlu0 %277
        %v279 = vsel %vm245, %v240, 0.0
        %280 = vadd.xlane.f32.xlu0 %v279
        %v281 = vpop.xlane.xlu0 %280
        %v282 = vsel %vm245, %v241, 0.0
        %283 = vadd.xlane.f32.xlu0 %v282
        %v284 = vpop.xlane.xlu0 %283
        %v285 = vsel %vm245, %v242, 0.0
        %286 = vadd.xlane.f32.xlu0 %v285
        %v287 = vpop.xlane.xlu0 %286
        %v288 = vsel %vm245, %v243, 0.0
        %289 = vadd.xlane.f32.xlu0 %v288
        %v290 = vpop.xlane.xlu0 %289
        %v291 = vsel %vm245, %v244, 0.0
        %292 = vadd.xlane.f32.xlu0 %v291
        %v293 = vpop.xlane.xlu0 %292
        %v294 = vstv %s222
        %v295 = vadd.f32 %v248, %v294
        %v296 = vadd.f32 %v251, %v294
        %v297 = vadd.f32 %v254, %v294
        %v298 = vadd.f32 %v257, %v294
        %v299 = vadd.f32 %v260, %v294
        %v300 = vadd.f32 %v263, %v294
        %v301 = vadd.f32 %v266, %v294
        %v302 = vadd.f32 %v269, %v294
        %v303 = vadd.f32 %v272, %v294
        %v304 = vadd.f32 %v275, %v294
        %v305 = vadd.f32 %v278, %v294
        %v306 = vadd.f32 %v281, %v294
        %v307 = vadd.f32 %v284, %v294
        %v308 = vadd.f32 %v287, %v294
        %v309 = vadd.f32 %v290, %v294
        %v310 = vadd.f32 %v293, %v294
        %v311 = vmul.f32 %v295, %v205
        %v312 = vmul.f32 %v296, %v206
        %v313 = vmul.f32 %v297, %v207
        %v314 = vmul.f32 %v298, %v208
        %v315 = vmul.f32 %v299, %v209
        %v316 = vmul.f32 %v300, %v210
        %v317 = vmul.f32 %v301, %v211
        %v318 = vmul.f32 %v302, %v212
        %v319 = vmul.f32 %v303, %v213
        %v320 = vmul.f32 %v304, %v214
        %v321 = vmul.f32 %v305, %v215
        %v322 = vmul.f32 %v306, %v216
        %v323 = vmul.f32 %v307, %v217
        %v324 = vmul.f32 %v308, %v218
        %v325 = vmul.f32 %v309, %v219
        %v326 = vmul.f32 %v310, %v220
        %v327 = vsel %vm245, %v311, 0.0
        %v328 = vsel %vm245, %v312, 0.0
        %v329 = vadd.f32 %v327, %v328
        %v330 = vrot.slane %v329, 4
        %v331 = vadd.f32 %v329, %v330
        %v332 = vrot.slane %v331, 2
        %v333 = vadd.f32 %v331, %v332
        %v334 = vrot.slane %v333, 1
        %v335 = vadd.f32 %v333, %v334
        %v336 = vsel %vm245, %v313, 0.0
        %v337 = vsel %vm245, %v314, 0.0
        %v338 = vadd.f32 %v336, %v337
        %v339 = vrot.slane %v338, 4
        %v340 = vadd.f32 %v338, %v339
        %v341 = vrot.slane %v340, 2
        %v342 = vadd.f32 %v340, %v341
        %v343 = vrot.slane %v342, 1
        %v344 = vadd.f32 %v342, %v343
        %v345 = vsel %vm245, %v315, 0.0
        %v346 = vsel %vm245, %v316, 0.0
        %v347 = vadd.f32 %v345, %v346
        %v348 = vrot.slane %v347, 4
        %v349 = vadd.f32 %v347, %v348
        %v350 = vrot.slane %v349, 2
        %v351 = vadd.f32 %v349, %v350
        %v352 = vrot.slane %v351, 1
        %v353 = vadd.f32 %v351, %v352
        %v354 = vsel %vm245, %v317, 0.0
        %v355 = vsel %vm245, %v318, 0.0
        %v356 = vadd.f32 %v354, %v355
        %v357 = vrot.slane %v356, 4
        %v358 = vadd.f32 %v356, %v357
        %v359 = vrot.slane %v358, 2
        %v360 = vadd.f32 %v358, %v359
        %v361 = vrot.slane %v360, 1
        %v362 = vadd.f32 %v360, %v361
        %v363 = vsel %vm245, %v319, 0.0
        %v364 = vsel %vm245, %v320, 0.0
        %v365 = vadd.f32 %v363, %v364
        %v366 = vrot.slane %v365, 4
        %v367 = vadd.f32 %v365, %v366
        %v368 = vrot.slane %v367, 2
        %v369 = vadd.f32 %v367, %v368
        %v370 = vrot.slane %v369, 1
        %v371 = vadd.f32 %v369, %v370
        %v372 = vsel %vm245, %v321, 0.0
        %v373 = vsel %vm245, %v322, 0.0
        %v374 = vadd.f32 %v372, %v373
        %v375 = vrot.slane %v374, 4
        %v376 = vadd.f32 %v374, %v375
        %v377 = vrot.slane %v376, 2
        %v378 = vadd.f32 %v376, %v377
        %v379 = vrot.slane %v378, 1
        %v380 = vadd.f32 %v378, %v379
        %v381 = vsel %vm245, %v323, 0.0
        %v382 = vsel %vm245, %v324, 0.0
        %v383 = vadd.f32 %v381, %v382
        %v384 = vrot.slane %v383, 4
        %v385 = vadd.f32 %v383, %v384
        %v386 = vrot.slane %v385, 2
        %v387 = vadd.f32 %v385, %v386
        %v388 = vrot.slane %v387, 1
        %v389 = vadd.f32 %v387, %v388
        %v390 = vsel %vm245, %v325, 0.0
        %v391 = vsel %vm245, %v326, 0.0
        %v392 = vadd.f32 %v390, %v391
        %v393 = vrot.slane %v392, 4
        %v394 = vadd.f32 %v392, %v393
        %v395 = vrot.slane %v394, 2
        %v396 = vadd.f32 %v394, %v395
        %v397 = vrot.slane %v396, 1
        %v398 = vadd.f32 %v396, %v397
        %vm407 = vcmask 1041409
        %v408 = vsel %vm407, %v344, %v335
        %vm409 = vcmask 1042434
        %v410 = vsel %vm409, %v353, %v408
        %vm411 = vcmask 1043459
        %v412 = vsel %vm411, %v362, %v410
        %vm413 = vcmask 1044484
        %v414 = vsel %vm413, %v371, %v412
        %vm415 = vcmask 1045509
        %v416 = vsel %vm415, %v380, %v414
        %vm417 = vcmask 1046534
        %v418 = vsel %vm417, %v389, %v416
        %vm419 = vcmask 1047559
        %v420 = vsel %vm419, %v398, %v418
        %422 = vst.msk [vmem:[%s198] sm:$0xff] %vm245, %v420
        %s423 = sand.u32 %s97, 1
        %s424 = scalar_lea.sflag [#allocation5], %s423
        %s425 = sand.u32 %s97, 1
        %s426 = smul.addr %s425, 8
        %s427 = scalar_lea.vmem [#allocation6], %s426
        // Predicated region
        $region37: #{tpu_custom_call.1} parent=31 // pred_check
          %p428 = pneg %p107
        $region38: #{tpu_custom_call.1} parent=31 // pred_check_branch
          %430 = sbr.rel (%p428) target = $region40
        $region39: #{tpu_custom_call.1} parent=31 // pred_region
          %s432 = ssub.s32 128, 128
          %433 = vsyncadd %s424, %s432
          %s434 = smul.addr %s21, 128
          %s435 = scalar_lea.hbm %s3, %s434
          %s437 = sshll.u32 %s427, 4
          %s438 = int_to_ptr.vmem [resolvable:$true] %s437
          %440 = dma.vmem_to_hbm [thread:$0]  %s438, 128, %s435, %s424
        $region40: #{tpu_custom_call.1} parent=31 // pred_fallthru
          _
      $region32: #{tpu_custom_call.1} parent=5 // pred_fallthru
        _
      %p441 = scmp.le.s32.totalorder 2, %s16
      // Predicated region
      $region41: #{tpu_custom_call.1} parent=5 // pred_check
        %p442 = pneg %p441
      $region42: #{tpu_custom_call.1} parent=5 // pred_check_branch
        %444 = sbr.rel (%p442) target = $region44
      $region43: #{tpu_custom_call.1} parent=5 // pred_region
        %s445 = ssub.s32 %s16, 2
        // Predicated region
        $region45: #{tpu_custom_call.1} parent=43 // pred_check
          %p446 = pneg %p113
        $region46: #{tpu_custom_call.1} parent=43 // pred_check_branch
          %448 = sbr.rel (%p446) target = $region48
        $region47: #{tpu_custom_call.1} parent=43 // pred_region
          %s449 = sand.u32 %s98, 1
          %s450 = scalar_lea.sflag [#allocation5], %s449
          %s451 = sand.u32 %s98, 1
          %s452 = smul.addr %s451, 8
          %s453 = scalar_lea.vmem [#allocation6], %s452
          %454 = dma.done %s450, 128
        $region48: #{tpu_custom_call.1} parent=43 // pred_fallthru
          _
      $region44: #{tpu_custom_call.1} parent=5 // pred_fallthru
        _
    $region6: #{tpu_custom_call.1} parent=1 // loop_footer
      %s20 = sadd.s32 1, %s16
    $region7: #{tpu_custom_call.1} parent=1 // loop_footer_branch
      %15 = sbr.rel target = $region3
    $region8: #{tpu_custom_call.1} parent=1 // loop_exit
      _
    %455 = vsyncpa [#allocation4], 1
    %s456 = scalar_lea.sflag [#allocation4], 1
    %457 = vsyncpa %s456, 1
    %458 = vsyncpa [#allocation5], 1
    %s459 = scalar_lea.sflag [#allocation5], 1
    %460 = vsyncpa %s459, 1

</llo_original>
